<compile_context>
chip_gen: v7x
topology: tpu7x:2x2x1
jax: 0.10.0
libtpu: 0.0.40
codegen_flags: <defaults>
</compile_context>

<pallas_src>
import math
import functools

import jax
import jax.numpy as jnp
from jax.experimental import pallas as pl
from jax.experimental.pallas import tpu as pltpu


# ----------------------------- tiling helper -----------------------------

def _pick_tile(dim, target, align):
    """Largest tile <= target that is a multiple of `align` and divides `dim`.
    If `dim` itself is not a multiple of `align`, fall back to the full dim
    (a block equal to the full extent is always legal)."""
    if dim % align != 0 or dim <= align:
        return dim
    t = min(dim, max(align, (target // align) * align))
    while dim % t != 0 or t % align != 0:
        t -= align
    return t


# ----------------------------- Pallas kernels -----------------------------

def _matmul_bias_kernel(x_ref, w_ref, b_ref, o_ref, acc_ref):
    # Tiled y = x @ W + b; bf16 MXU operands, f32 accumulation in VMEM scratch.
    @pl.when(pl.program_id(2) == 0)
    def _():
        acc_ref[...] = jnp.zeros_like(acc_ref)

    acc_ref[...] += jnp.dot(x_ref[...].astype(jnp.bfloat16), w_ref[...],
                            preferred_element_type=jnp.float32)

    @pl.when(pl.program_id(2) == pl.num_programs(2) - 1)
    def _():
        o_ref[...] = (acc_ref[...] + b_ref[...]).astype(o_ref.dtype)


def matmul_bias(x, w, b, tm=512, tn=512, tk=512):
    M, K = x.shape
    K2, N = w.shape
    assert K == K2
    TM = _pick_tile(M, tm, 8)
    TN = _pick_tile(N, tn, 128)
    TK = _pick_tile(K, tk, 128)
    grid = (M // TM, N // TN, K // TK)
    return pl.pallas_call(
        _matmul_bias_kernel,
        grid=grid,
        in_specs=[
            pl.BlockSpec((TM, TK), lambda i, j, k: (i, k)),
            pl.BlockSpec((TK, TN), lambda i, j, k: (k, j)),
            pl.BlockSpec((1, TN), lambda i, j, k: (0, j)),
        ],
        out_specs=pl.BlockSpec((TM, TN), lambda i, j, k: (i, j)),
        out_shape=jax.ShapeDtypeStruct((M, N), jnp.float32),
        scratch_shapes=[pltpu.VMEM((TM, TN), jnp.float32)],
        compiler_params=pltpu.CompilerParams(
            dimension_semantics=("parallel", "parallel", "arbitrary")),
    )(x, w, b.reshape(1, N))


def _torch_layernorm(y, a, g, eps, d_model):
    # torch-style: alpha*(y-mean)/(y.std(unbiased)+eps)+beta, all f32.
    mean = jnp.mean(y, axis=-1, keepdims=True)
    diff = y - mean
    var = jnp.sum(diff * diff, axis=-1, keepdims=True) * (1.0 / (d_model - 1))
    inv = pl.reciprocal(jnp.sqrt(var) + eps, approx=True)      # EUP, not VALU divide
    return a * diff * inv + g


def _matmul_res_ln_kernel(x_ref, w_ref, b_ref, r_ref, a_ref, g_ref, o_ref,
                          acc_ref, *, eps, d_model):
    # Fused: y = residual + (x @ W + b), then torch-style LayerNorm.
    @pl.when(pl.program_id(1) == 0)
    def _():
        acc_ref[...] = jnp.zeros_like(acc_ref)

    acc_ref[...] += jnp.dot(x_ref[...].astype(jnp.bfloat16), w_ref[...],
                            preferred_element_type=jnp.float32)

    @pl.when(pl.program_id(1) == pl.num_programs(1) - 1)
    def _():
        y = acc_ref[...] + b_ref[...] + r_ref[...]
        o_ref[...] = _torch_layernorm(y, a_ref[...], g_ref[...],
                                      eps, d_model).astype(o_ref.dtype)


def matmul_residual_layernorm(x, w, b, residual, alpha, beta,
                              eps=1e-6, tm=256, tk=512):
    # TODO(synk): for d_model >= ~2k the full-N blocks need retiling (two-pass LN)
    # to fit v7x's 64 MiB VMEM; fine for typical d_model <= 1k.
    M, K = x.shape
    K2, N = w.shape
    assert K == K2 and residual.shape == (M, N)
    TM = _pick_tile(M, tm, 8)
    TK = _pick_tile(K, tk, 128)
    grid = (M // TM, K // TK)
    return pl.pallas_call(
        functools.partial(_matmul_res_ln_kernel, eps=eps, d_model=N),
        grid=grid,
        in_specs=[
            pl.BlockSpec((TM, TK), lambda i, k: (i, k)),
            pl.BlockSpec((TK, N), lambda i, k: (k, 0)),
            pl.BlockSpec((1, N), lambda i, k: (0, 0)),
            pl.BlockSpec((TM, N), lambda i, k: (i, 0)),
            pl.BlockSpec((1, N), lambda i, k: (0, 0)),
            pl.BlockSpec((1, N), lambda i, k: (0, 0)),
        ],
        out_specs=pl.BlockSpec((TM, N), lambda i, k: (i, 0)),
        out_shape=jax.ShapeDtypeStruct((M, N), jnp.float32),
        scratch_shapes=[pltpu.VMEM((TM, N), jnp.float32)],
        compiler_params=pltpu.CompilerParams(
            dimension_semantics=("parallel", "arbitrary")),
    )(x, w, b.reshape(1, N), residual, alpha.reshape(1, N), beta.reshape(1, N))


def _ff_res_ln_kernel(x_ref, w1_ref, b1_ref, w2_ref, b2_ref, a_ref, g_ref,
                      o_ref, acc_ref, *, eps, d_model):
    # Fused FF sublayer: for each d_ff tile f
    #   h_f = relu(x @ W1[:, f] + b1[f])            (TM, TF), never leaves VMEM
    #   acc += h_f @ W2[f, :]                       (TM, D)  f32 accumulator
    # epilogue: y = acc + b2 + x (residual); LayerNorm(y).
    @pl.when(pl.program_id(1) == 0)
    def _():
        acc_ref[...] = jnp.zeros_like(acc_ref)

    h = jnp.dot(x_ref[...].astype(jnp.bfloat16), w1_ref[...],
                preferred_element_type=jnp.float32) + b1_ref[...]
    h = jnp.maximum(h, 0.0)
    acc_ref[...] += jnp.dot(h.astype(jnp.bfloat16), w2_ref[...],
                            preferred_element_type=jnp.float32)

    @pl.when(pl.program_id(1) == pl.num_programs(1) - 1)
    def _():
        y = acc_ref[...] + b2_ref[...] + x_ref[...]
        o_ref[...] = _torch_layernorm(y, a_ref[...], g_ref[...],
                                      eps, d_model).astype(o_ref.dtype)


def feedforward_residual_layernorm(x, w1, b1, w2, b2, alpha, beta,
                                   eps=1e-6, tm=256, tf=512):
    M, D = x.shape
    D2, F = w1.shape
    F2, D3 = w2.shape
    assert D == D2 and F == F2 and D3 == D
    TM = _pick_tile(M, tm, 8)
    TF = _pick_tile(F, tf, 128)
    grid = (M // TM, F // TF)
    return pl.pallas_call(
        functools.partial(_ff_res_ln_kernel, eps=eps, d_model=D),
        grid=grid,
        in_specs=[
            pl.BlockSpec((TM, D), lambda i, f: (i, 0)),   # x (matmul input AND residual)
            pl.BlockSpec((D, TF), lambda i, f: (0, f)),   # W1 tile (bf16)
            pl.BlockSpec((1, TF), lambda i, f: (0, f)),   # b1 tile
            pl.BlockSpec((TF, D), lambda i, f: (f, 0)),   # W2 tile (bf16)
            pl.BlockSpec((1, D), lambda i, f: (0, 0)),    # b2
            pl.BlockSpec((1, D), lambda i, f: (0, 0)),    # alpha
            pl.BlockSpec((1, D), lambda i, f: (0, 0)),    # beta
        ],
        out_specs=pl.BlockSpec((TM, D), lambda i, f: (i, 0)),
        out_shape=jax.ShapeDtypeStruct((M, D), jnp.float32),
        scratch_shapes=[pltpu.VMEM((TM, D), jnp.float32)],
        compiler_params=pltpu.CompilerParams(
            dimension_semantics=("parallel", "arbitrary")),
    )(x, w1, b1.reshape(1, F), w2, b2.reshape(1, D),
      alpha.reshape(1, D), beta.reshape(1, D))


def _ln_kernel(x_ref, a_ref, g_ref, o_ref, *, eps, d_model):
    o_ref[...] = _torch_layernorm(x_ref[...], a_ref[...], g_ref[...],
                                  eps, d_model).astype(o_ref.dtype)


def layernorm(x, alpha, beta, eps=1e-6, tm=512):
    # Norm-only kernel: no zero residual is materialized / DMA'd.
    M, D = x.shape
    TM = _pick_tile(M, tm, 8)
    return pl.pallas_call(
        functools.partial(_ln_kernel, eps=eps, d_model=D),
        grid=(M // TM,),
        in_specs=[pl.BlockSpec((TM, D), lambda i: (i, 0)),
                  pl.BlockSpec((1, D), lambda i: (0, 0)),
                  pl.BlockSpec((1, D), lambda i: (0, 0))],
        out_specs=pl.BlockSpec((TM, D), lambda i: (i, 0)),
        out_shape=jax.ShapeDtypeStruct((M, D), jnp.float32),
        compiler_params=pltpu.CompilerParams(dimension_semantics=("parallel",)),
    )(x, alpha.reshape(1, D), beta.reshape(1, D))


def _embed_pe_kernel(x_ref, pe_ref, o_ref, *, scale):
    # Embedder (*sqrt(D)) and PositionalEncoder (*sqrt(D) then +pe) fused:
    # total scale == d_model (as written in the reference module).
    o_ref[0] = x_ref[0] * scale + pe_ref[...]


def embed_pe(emb, pe_slice, scale):
    B, S, D = emb.shape
    return pl.pallas_call(
        functools.partial(_embed_pe_kernel, scale=scale),
        grid=(B,),
        in_specs=[pl.BlockSpec((1, S, D), lambda b: (b, 0, 0)),
                  pl.BlockSpec((S, D), lambda b: (0, 0))],
        out_specs=pl.BlockSpec((1, S, D), lambda b: (b, 0, 0)),
        out_shape=jax.ShapeDtypeStruct((B, S, D), jnp.float32),
        compiler_params=pltpu.CompilerParams(dimension_semantics=("parallel",)),
    )(emb, pe_slice)


def _attn_head(q, k, v):
    # q:(Sq,dk)  k,v:(Sk,dk).  1/sqrt(d_k) is pre-folded into W_q/b_q.
    # bf16 MXU operands, f32 scores/softmax.
    s = jax.lax.dot_general(q.astype(jnp.bfloat16), k.astype(jnp.bfloat16),
                            (((1,), (1,)), ((), ())),
                            preferred_element_type=jnp.float32)
    s = s - jnp.max(s, axis=-1, keepdims=True)          # numerically-stable softmax
    e = jnp.exp(s)
    p = e * pl.reciprocal(jnp.sum(e, axis=-1, keepdims=True), approx=True)
    return jnp.dot(p.astype(jnp.bfloat16), v.astype(jnp.bfloat16),
                   preferred_element_type=jnp.float32)


def _attn_self_kernel(qkv_ref, o_ref, *, heads, d_k):
    # One batch element per grid step; all heads via static slices of the packed
    # (S, 3D) q|k|v block; head outputs concatenated so the output is written
    # with a single lane-dense (S, D) store (no masked vst.msk per head).
    D = heads * d_k
    x = qkv_ref[0]                                      # (S, 3D)
    outs = []
    for h in range(heads):                              # unrolled; heads is small
        lo, hi = h * d_k, (h + 1) * d_k
        outs.append(_attn_head(x[:, lo:hi],
                               x[:, D + lo:D + hi],
                               x[:, 2 * D + lo:2 * D + hi]))
    o_ref[0] = jnp.concatenate(outs, axis=-1).astype(o_ref.dtype)


def _attn_cross_kernel(q_ref, kv_ref, o_ref, *, heads, d_k):
    D = heads * d_k
    q_all = q_ref[0]                                    # (Sq, D)
    kv = kv_ref[0]                                      # (Sk, 2D) packed k|v
    outs = []
    for h in range(heads):
        lo, hi = h * d_k, (h + 1) * d_k
        outs.append(_attn_head(q_all[:, lo:hi],
                               kv[:, lo:hi],
                               kv[:, D + lo:D + hi]))
    o_ref[0] = jnp.concatenate(outs, axis=-1).astype(o_ref.dtype)


def self_attention(qkv, heads, d_k):
    B, S, D3 = qkv.shape
    D = heads * d_k
    return pl.pallas_call(
        functools.partial(_attn_self_kernel, heads=heads, d_k=d_k),
        grid=(B,),
        in_specs=[pl.BlockSpec((1, S, D3), lambda b: (b, 0, 0))],
        out_specs=pl.BlockSpec((1, S, D), lambda b: (b, 0, 0)),
        out_shape=jax.ShapeDtypeStruct((B, S, D), jnp.float32),
        compiler_params=pltpu.CompilerParams(dimension_semantics=("parallel",)),
    )(qkv)


def cross_attention(q, kv, heads, d_k):
    B, Sq, D = q.shape
    _, Sk, D2 = kv.shape
    return pl.pallas_call(
        functools.partial(_attn_cross_kernel, heads=heads, d_k=d_k),
        grid=(B,),
        in_specs=[pl.BlockSpec((1, Sq, D), lambda b: (b, 0, 0)),
                  pl.BlockSpec((1, Sk, D2), lambda b: (b, 0, 0))],
        out_specs=pl.BlockSpec((1, Sq, D), lambda b: (b, 0, 0)),
        out_shape=jax.ShapeDtypeStruct((B, Sq, D), jnp.float32),
        compiler_params=pltpu.CompilerParams(dimension_semantics=("parallel",)),
    )(q, kv)


# ------------------------------- model glue -------------------------------

def decoder_layer(p, x, e_outputs, heads, d_k):
    B, S, D = x.shape
    M = B * S
    Bs, Ss, _ = e_outputs.shape
    x2 = x.reshape(M, D)

    # --- self-attention sublayer (mask=None only) ---
    qkv = matmul_bias(x2, p["attn1"]["w_qkv"], p["attn1"]["b_qkv"])      # (M, 3D)
    a1 = self_attention(qkv.reshape(B, S, 3 * D), heads, d_k).reshape(M, D)
    x2 = matmul_residual_layernorm(a1, p["attn1"]["wo"], p["attn1"]["bo"],
                                   x2, p["n1_a"], p["n1_b"])

    # --- cross-attention sublayer ---
    q = matmul_bias(x2, p["attn2"]["wq"], p["attn2"]["bq"])              # (M, D)
    kv = matmul_bias(e_outputs.reshape(Bs * Ss, D),
                     p["attn2"]["w_kv"], p["attn2"]["b_kv"])             # (Ms, 2D)
    a2 = cross_attention(q.reshape(B, S, D), kv.reshape(Bs, Ss, 2 * D),
                         heads, d_k).reshape(M, D)
    x2 = matmul_residual_layernorm(a2, p["attn2"]["wo"], p["attn2"]["bo"],
                                   x2, p["n2_a"], p["n2_b"])

    # --- feed-forward sublayer, fully fused (ReLU, FF2, residual, LN) ---
    x2 = feedforward_residual_layernorm(x2, p["ff"]["w1"], p["ff"]["b1"],
                                        p["ff"]["w2"], p["ff"]["b2"],
                                        p["n3_a"], p["n3_b"])
    return x2.reshape(B, S, D)


def decoder_forward(params, trg, e_outputs, src_mask=None, trg_mask=None):
    # TODO(synk): non-None masks are not supported (reference `unsequeeze` typo).
    del src_mask, trg_mask
    B, S = trg.shape
    D = params["d_model"]
    heads = params["heads"]
    d_k = D // heads

    # Embedder + PositionalEncoder: the gather stays in XLA, scale + PE add fused.
    emb = params["embed"][trg]                       # (B, S, D)
    x = embed_pe(emb, params["pe"][:S], float(D))    # sqrt(D) * sqrt(D) == D

    for lp in params["layers"]:
        x = decoder_layer(lp, x, e_outputs, heads, d_k)

    # final LayerNorm (norm-only kernel)
    x2 = layernorm(x.reshape(B * S, D), params["norm_a"], params["norm_b"])
    return x2.reshape(B, S, D)


# ----------------------------- parameter init ------------------------------

def _lin_init(key, fan_in, fan_out):
    kw, kb = jax.random.split(key)
    w = jax.random.normal(kw, (fan_in, fan_out), jnp.float32) / math.sqrt(fan_in)
    b = jax.random.normal(kb, (fan_out,), jnp.float32) * 0.01
    return w, b


def _mha_self_init(key, d_model, d_k):
    ks = jax.random.split(key, 4)
    wq, bq = _lin_init(ks[0], d_model, d_model)
    wk, bk = _lin_init(ks[1], d_model, d_model)
    wv, bv = _lin_init(ks[2], d_model, d_model)
    wo, bo = _lin_init(ks[3], d_model, d_model)
    s = 1.0 / math.sqrt(d_k)                              # fold 1/sqrt(d_k) into W_q
    return dict(
        w_qkv=jnp.concatenate([wq * s, wk, wv], axis=1).astype(jnp.bfloat16),
        b_qkv=jnp.concatenate([bq * s, bk, bv]),
        wo=wo.astype(jnp.bfloat16), bo=bo)


def _mha_cross_init(key, d_model, d_k):
    ks = jax.random.split(key, 4)
    wq, bq = _lin_init(ks[0], d_model, d_model)
    wk, bk = _lin_init(ks[1], d_model, d_model)
    wv, bv = _lin_init(ks[2], d_model, d_model)
    wo, bo = _lin_init(ks[3], d_model, d_model)
    s = 1.0 / math.sqrt(d_k)
    return dict(
        wq=(wq * s).astype(jnp.bfloat16), bq=bq * s,
        w_kv=jnp.concatenate([wk, wv], axis=1).astype(jnp.bfloat16),
        b_kv=jnp.concatenate([bk, bv]),
        wo=wo.astype(jnp.bfloat16), bo=bo)


def _pe_table(max_seq_len, d_model):
    pos = jnp.arange(max_seq_len, dtype=jnp.float32)[:, None]          # (L, 1)
    i = jnp.arange(0, d_model, 2, dtype=jnp.float32)[None, :]          # (1, D/2)
    ang = pos / jnp.power(10000.0, i / d_model)                        # (L, D/2)
    pe = jnp.zeros((max_seq_len, d_model), jnp.float32)
    pe = pe.at[:, 0::2].set(jnp.sin(ang))
    pe = pe.at[:, 1::2].set(jnp.cos(ang))
    return pe


def init_decoder_params(key, vocab_size, d_model, N, heads, d_ff=2048,
                        max_seq_len=80):
    d_k = d_model // heads
    keys = jax.random.split(key, 2 + N)
    params = dict(
        d_model=d_model,
        heads=heads,
        embed=jax.random.normal(keys[0], (vocab_size, d_model), jnp.float32),
        pe=_pe_table(max_seq_len, d_model),
        norm_a=jnp.ones((d_model,), jnp.float32),
        norm_b=jnp.zeros((d_model,), jnp.float32),
        layers=[],
    )
    for n in range(N):
        lk = jax.random.split(keys[2 + n], 4)
        w1, b1 = _lin_init(lk[2], d_model, d_ff)
        w2, b2 = _lin_init(lk[3], d_ff, d_model)
        params["layers"].append(dict(
            attn1=_mha_self_init(lk[0], d_model, d_k),
            attn2=_mha_cross_init(lk[1], d_model, d_k),
            ff=dict(w1=w1.astype(jnp.bfloat16), b1=b1,
                    w2=w2.astype(jnp.bfloat16), b2=b2),
            n1_a=jnp.ones((d_model,), jnp.float32),
            n1_b=jnp.zeros((d_model,), jnp.float32),
            n2_a=jnp.ones((d_model,), jnp.float32),
            n2_b=jnp.zeros((d_model,), jnp.float32),
            n3_a=jnp.ones((d_model,), jnp.float32),
            n3_b=jnp.zeros((d_model,), jnp.float32),
        ))
    return params


# ----------------------------------- main -----------------------------------

if __name__ == "__main__":
    vocab_size = 50
    d_model = 32
    N = 2
    heads = 4
    B, S, S_src = 2, 8, 8

    root = jax.random.PRNGKey(0)
    k_params, k_trg, k_enc = jax.random.split(root, 3)

    params = init_decoder_params(k_params, vocab_size, d_model, N, heads)

    trg = jax.random.randint(k_trg, (B, S), 0, vocab_size, dtype=jnp.int32)
    e_outputs = jax.random.normal(k_enc, (B, S_src, d_model), jnp.float32)

    out = decoder_forward(params, trg, e_outputs, src_mask=None, trg_mask=None)
    out = jax.block_until_ready(out)

    assert out.shape == (B, S, d_model)
    assert out.dtype == jnp.float32
    assert bool(jnp.all(jnp.isfinite(out)))
    print("KERNEL_OK")
</pallas_src>

<mosaic_0001>
module attributes {stable_mosaic.version = 11 : i64} {
  func.func @_embed_pe_kernel(%arg0: i32, %arg1: memref<1x8x32xf32, #tpu.memory_space<vmem>>, %arg2: memref<8x32xf32, #tpu.memory_space<vmem>>, %arg3: memref<1x8x32xf32, #tpu.memory_space<vmem>>) attributes {dimension_semantics = [#tpu.dimension_semantics<parallel>], iteration_bounds = array<i64: 2>, scalar_prefetch = 0 : i64, scratch_operands = 0 : i64, tpu.core_type = #tpu.core_type<tc>, window_params = [{transform_indices = @transform_0, window_bounds = array<i64: 1, 8, 32>}, {pipeline_mode = #tpu.pipeline_mode<synchronous>, transform_indices = @transform_1, window_bounds = array<i64: 8, 32>}, {transform_indices = @transform_2, window_bounds = array<i64: 1, 8, 32>}]} {
    %c0 = arith.constant 0 : index
    %c0_0 = arith.constant 0 : index
    %c0_1 = arith.constant 0 : index
    %0 = vector.load %arg1[%c0, %c0_0, %c0_1] : memref<1x8x32xf32, #tpu.memory_space<vmem>>, vector<1x8x32xf32>
    %1 = vector.shape_cast %0 : vector<1x8x32xf32> to vector<8x32xf32>
    %cst = arith.constant 3.200000e+01 : f32
    %2 = vector.broadcast %cst : f32 to vector<8x32xf32>
    %3 = arith.mulf %1, %2 : vector<8x32xf32>
    %c0_2 = arith.constant 0 : index
    %c0_3 = arith.constant 0 : index
    %4 = vector.load %arg2[%c0_2, %c0_3] : memref<8x32xf32, #tpu.memory_space<vmem>>, vector<8x32xf32>
    %5 = arith.addf %3, %4 : vector<8x32xf32>
    %c0_4 = arith.constant 0 : index
    %c0_5 = arith.constant 0 : index
    %c0_6 = arith.constant 0 : index
    %6 = vector.load %arg3[%c0_4, %c0_5, %c0_6] : memref<1x8x32xf32, #tpu.memory_space<vmem>>, vector<1x8x32xf32>
    %7 = vector.shape_cast %6 : vector<1x8x32xf32> to vector<8x32xf32>
    %8 = vector.shape_cast %5 : vector<8x32xf32> to vector<1x8x32xf32>
    tpu.vector_store %arg3[%c0_4, %c0_5, %c0_6], %8 {strides = array<i32>} : memref<1x8x32xf32, #tpu.memory_space<vmem>>, vector<1x8x32xf32>,
    return
  }
  func.func @transform_0(%arg0: i32) -> (i32, i32, i32) {
    %c0_i32 = arith.constant 0 : i32
    %c0_i32_0 = arith.constant 0 : i32
    %c0_i32_1 = arith.constant 0 : i32
    return %arg0, %c0_i32, %c0_i32_0 : i32, i32, i32
  }
  func.func @transform_1(%arg0: i32) -> (i32, i32) {
    %c0_i32 = arith.constant 0 : i32
    %c0_i32_0 = arith.constant 0 : i32
    %c0_i32_1 = arith.constant 0 : i32
    return %c0_i32, %c0_i32_0 : i32, i32
  }
  func.func @transform_2(%arg0: i32) -> (i32, i32, i32) {
    %c0_i32 = arith.constant 0 : i32
    %c0_i32_0 = arith.constant 0 : i32
    %c0_i32_1 = arith.constant 0 : i32
    return %arg0, %c0_i32, %c0_i32_0 : i32, i32, i32
  }
}

</mosaic_0001>

<llo_original>
// kernel: tpu_custom_call.1
$region0: #{tpu_custom_call.1}
  #allocation0 [shape = 'u32[]', space=smem, size = 0x4, offset = 0x4, fixed_abs, tag = 'smem constant byte address 0x4 - core index']
  #allocation1 [shape = 'u32[144,128]{1,0:T(1,128)}', space=vmem, size = 0x12000, scoped, tag = 'internal scratch']
  %s0 = inlined_call_operand.hbm [shape: f32[2,8,32], index: 0, kind: input, shape index: {}]
  %s1 = inlined_call_operand.hbm [shape: f32[8,32], index: 1, kind: input, shape index: {}]
  %s2 = inlined_call_operand.hbm [shape: f32[2,8,32], index: 2, kind: output, shape index: {}]
  %s3 = sld [smem:[#allocation0]]
  $region49: #{tpu_custom_call.1} parent=0
    _
  %s5 = ssub.s32 1, %s3
  %s6 = scalar_select 0, %s5, %s3
  $region1: #{tpu_custom_call.1} parent=0
    #allocation2 [shape = 'u8[8192]{0}', space=vmem, size = 0x2000, scoped, tag = 'input window, operand 0']
    #allocation3 [shape = 's32[2]{0}', space=sflag, size = 0x8, scoped, tag = 'scoped memory for tpu_custom_call.1']
    #allocation4 [shape = 's32[2]{0}', space=sflag, size = 0x8, scoped, tag = 'scoped memory for tpu_custom_call.1']
    #allocation5 [shape = 'u8[4096]{0}', space=vmem, size = 0x1000, scoped, tag = 'input window, operand 1, single buffered']
    #allocation6 [shape = 's32[1]{0}', space=sflag, size = 0x4, scoped, tag = 'scoped memory for tpu_custom_call.1']
    #allocation7 [shape = 'u8[8192]{0}', space=vmem, size = 0x2000, scoped, tag = 'output window, operand 0']
    %7 = vsyncpa [#allocation3], 0
    %s8 = scalar_lea.sflag [#allocation3], 1
    %9 = vsyncpa %s8, 0
    %10 = vsyncpa [#allocation6], 0
    %11 = vsyncpa [#allocation4], 0
    %s12 = scalar_lea.sflag [#allocation4], 1
    %13 = vsyncpa %s12, 0
    loop: start=0, step=1, limit=4
    $region2: #{tpu_custom_call.1} parent=1 // loop_pre_header
      _
    $region3: #{tpu_custom_call.1} parent=1 // loop_header
      %s15 = sphi 0, %s19
      %p16 = scmp.ge.s32.totalorder %s15, 4
      %s25 = sphi 0, %s27
      %s28 = sphi 0, %s25
      %s29 = sphi 0, %s28
      %s45 = sphi 0, %s29
      %s49 = sphi 0, %s49
      %s51 = sphi 0, %s49
      %s52 = sphi 0, %s51
      %s66 = sphi 0, %s52
      %s72 = sphi 0, %s74
      %s75 = sphi 0, %s72
      %s76 = sphi 0, %s75
      %s92 = sphi 0, %s76
    $region4: #{tpu_custom_call.1} parent=1 // loop_header_branch
      %18 = sbr.rel (%p16) target = $region8
    $region5: #{tpu_custom_call.1} parent=1 // loop_body
      %s20 = ssub.s32 %s15, 1
      %s21 = ssub.s32 %s15, 2
      %s22 = sadd.s32 %s15, 1
      %s23 = ssub.s32 %s15, %s22
      %p24 = scmp.eq.s32.totalorder %s23, 0
      %s26 = sadd.s32 %s25, 1
      %s27 = scalar_select %p24, %s25, %s26
      %p30 = pneg %p24
      %p31 = scmp.eq.s32.totalorder %s15, 1
      %p32 = por %p30, %p31
      %p33 = scmp.ne.s32.totalorder %s25, %s28
      %p34 = scmp.eq.s32.totalorder %s15, 0
      %p35 = por %p33, %p34
      %p36 = scmp.ne.s32.totalorder %s25, %s28
      %p37 = scmp.eq.s32.totalorder %s20, 1
      %p38 = por %p36, %p37
      %p39 = scmp.ne.s32.totalorder %s28, %s29
      %p40 = scmp.eq.s32.totalorder %s20, 0
      %p41 = por %p39, %p40
      %p42 = scmp.ne.s32.totalorder %s28, %s29
      %p43 = scmp.eq.s32.totalorder %s21, 1
      %p44 = por %p42, %p43
      %p46 = scmp.ne.s32.totalorder %s29, %s45
      %p47 = scmp.eq.s32.totalorder %s21, 0
      %p48 = por %p46, %p47
      %s50 = sadd.s32 %s49, 1
      %p53 = scmp.eq.s32.totalorder %s15, 1
      %p54 = scmp.ne.s32.totalorder %s49, %s51
      %p55 = scmp.eq.s32.totalorder %s15, 0
      %p56 = por %p54, %p55
      %p57 = scmp.ne.s32.totalorder %s49, %s51
      %p58 = scmp.eq.s32.totalorder %s20, 1
      %p59 = por %p57, %p58
      %p60 = scmp.ne.s32.totalorder %s51, %s52
      %p61 = scmp.eq.s32.totalorder %s20, 0
      %p62 = por %p60, %p61
      %p63 = scmp.ne.s32.totalorder %s51, %s52
      %p64 = scmp.eq.s32.totalorder %s21, 1
      %p65 = por %p63, %p64
      %p67 = scmp.ne.s32.totalorder %s52, %s66
      %p68 = scmp.eq.s32.totalorder %s21, 0
      %p69 = por %p67, %p68
      %s70 = ssub.s32 %s15, %s22
      %p71 = scmp.eq.s32.totalorder %s70, 0
      %s73 = sadd.s32 %s72, 1
      %s74 = scalar_select %p71, %s72, %s73
      %p77 = pneg %p71
      %p78 = scmp.eq.s32.totalorder %s15, 1
      %p79 = por %p77, %p78
      %p80 = scmp.ne.s32.totalorder %s72, %s75
      %p81 = scmp.eq.s32.totalorder %s15, 0
      %p82 = por %p80, %p81
      %p83 = scmp.ne.s32.totalorder %s72, %s75
      %p84 = scmp.eq.s32.totalorder %s20, 1
      %p85 = por %p83, %p84
      %p86 = scmp.ne.s32.totalorder %s75, %s76
      %p87 = scmp.eq.s32.totalorder %s20, 0
      %p88 = por %p86, %p87
      %p89 = scmp.ne.s32.totalorder %s75, %s76
      %p90 = scmp.eq.s32.totalorder %s21, 1
      %p91 = por %p89, %p90
      %p93 = scmp.ne.s32.totalorder %s76, %s92
      %p94 = scmp.eq.s32.totalorder %s21, 0
      %p95 = por %p93, %p94
      %p96 = scmp.le.s32.totalorder 1, %s15
      %p97 = scmp.lt.s32.totalorder %s15, 3
      %p98 = pnand %p96, %p97
      %p99 = pneg %p98
      // Predicated region
      $region9: #{tpu_custom_call.1} parent=5 // pred_check
        _
      $region10: #{tpu_custom_call.1} parent=5 // pred_check_branch
        %101 = sbr.rel (%p98) target = $region12
      $region11: #{tpu_custom_call.1} parent=5 // pred_region
        %s102 = ssub.s32 %s15, 1
        // Predicated region
        $region13: #{tpu_custom_call.1} parent=11 // pred_check
          %p103 = pneg %p62
        $region14: #{tpu_custom_call.1} parent=11 // pred_check_branch
          %105 = sbr.rel (%p103) target = $region16
        $region15: #{tpu_custom_call.1} parent=11 // pred_region
          %s107 = ssub.s32 128, 128
          %108 = vsyncadd [#allocation6], %s107
          %s110 = sshll.u32 [#allocation5], 4
          %s111 = int_to_ptr.vmem [resolvable:$true] %s110
          %113 = dma.hbm_to_vmem [thread:$0]  %s1, 128, %s111, [#allocation6]
        $region16: #{tpu_custom_call.1} parent=11 // pred_fallthru
          _
      $region12: #{tpu_custom_call.1} parent=5 // pred_fallthru
        _
      %p114 = scmp.lt.s32.totalorder %s15, 2
      // Predicated region
      $region17: #{tpu_custom_call.1} parent=5 // pred_check
        %p115 = pneg %p114
      $region18: #{tpu_custom_call.1} parent=5 // pred_check_branch
        %117 = sbr.rel (%p115) target = $region20
      $region19: #{tpu_custom_call.1} parent=5 // pred_region
        // Predicated region
        $region21: #{tpu_custom_call.1} parent=19 // pred_check
          %p118 = pneg %p35
        $region22: #{tpu_custom_call.1} parent=19 // pred_check_branch
          %120 = sbr.rel (%p118) target = $region24
        $region23: #{tpu_custom_call.1} parent=19 // pred_region
          %s121 = sand.u32 %s25, 1
          %s122 = scalar_lea.sflag [#allocation3], %s121
          %s123 = sand.u32 %s25, 1
          %s124 = smul.addr %s123, 8
          %s125 = scalar_lea.vmem [#allocation2], %s124
          %s127 = ssub.s32 128, 128
          %128 = vsyncadd %s122, %s127
          %s129 = smul.addr %s15, 128
          %s130 = scalar_lea.hbm %s0, %s129
          %s132 = sshll.u32 %s125, 4
          %s133 = int_to_ptr.vmem [resolvable:$true] %s132
          %135 = dma.hbm_to_vmem [thread:$0]  %s130, 128, %s133, %s122
        $region24: #{tpu_custom_call.1} parent=19 // pred_fallthru
          _
      $region20: #{tpu_custom_call.1} parent=5 // pred_fallthru
        _
      %p136 = scmp.le.s32.totalorder 1, %s15
      %p137 = scmp.lt.s32.totalorder %s15, 3
      %p138 = pnand %p136, %p137
      %p139 = pneg %p138
      // Predicated region
      $region25: #{tpu_custom_call.1} parent=5 // pred_check
        _
      $region26: #{tpu_custom_call.1} parent=5 // pred_check_branch
        %141 = sbr.rel (%p138) target = $region28
      $region27: #{tpu_custom_call.1} parent=5 // pred_region
        %s142 = ssub.s32 %s15, 1
        %s143 = sand.u32 %s28, 1
        %s144 = scalar_lea.sflag [#allocation3], %s143
        %s145 = sand.u32 %s28, 1
        %s146 = smul.addr %s145, 8
        %s147 = scalar_lea.vmem [#allocation2], %s146
        // Predicated region
        $region29: #{tpu_custom_call.1} parent=27 // pred_check
          %p148 = pneg %p41
        $region30: #{tpu_custom_call.1} parent=27 // pred_check_branch
          %150 = sbr.rel (%p148) target = $region32
        $region31: #{tpu_custom_call.1} parent=27 // pred_region
          %151 = dma.done %s144, 128
        $region32: #{tpu_custom_call.1} parent=27 // pred_fallthru
          _
        // Predicated region
        $region33: #{tpu_custom_call.1} parent=27 // pred_check
          %p152 = pneg %p62
        $region34: #{tpu_custom_call.1} parent=27 // pred_check_branch
          %154 = sbr.rel (%p152) target = $region36
        $region35: #{tpu_custom_call.1} parent=27 // pred_region
          %155 = dma.done [#allocation6], 128
        $region36: #{tpu_custom_call.1} parent=27 // pred_fallthru
          _
        %s156 = sand.u32 %s28, 1
        %s157 = scalar_lea.sflag [#allocation3], %s156
        %s158 = sand.u32 %s28, 1
        %s159 = smul.addr %s158, 8
        %s160 = scalar_lea.vmem [#allocation2], %s159
        %p161 = pneg %p41
        %p162 = pneg %p38
        %p163 = pneg %p62
        %p164 = pneg %p59
        %p165 = pneg %p88
        %p166 = pneg %p85
        %s167 = sand.u32 %s75, 1
        %s168 = scalar_lea.sflag [#allocation4], %s167
        %s169 = sand.u32 %s75, 1
        %s170 = smul.addr %s169, 8
        %s171 = scalar_lea.vmem [#allocation7], %s170
        %v172 = vld [vmem:[%s147] sm:$0xff]
        %v173 = vmul.f32 %v172, 32.0
        %v174 = vld [vmem:[#allocation5] sm:$0xff]
        %v175 = vadd.f32 %v173, %v174
        %vm176 = vcmask 261120
        %177 = vst.msk [vmem:[%s171] sm:$0xff] %vm176, %v175
        %s178 = sand.u32 %s75, 1
        %s179 = scalar_lea.sflag [#allocation4], %s178
        %s180 = sand.u32 %s75, 1
        %s181 = smul.addr %s180, 8
        %s182 = scalar_lea.vmem [#allocation7], %s181
        // Predicated region
        $region37: #{tpu_custom_call.1} parent=27 // pred_check
          %p183 = pneg %p85
        $region38: #{tpu_custom_call.1} parent=27 // pred_check_branch
          %185 = sbr.rel (%p183) target = $region40
        $region39: #{tpu_custom_call.1} parent=27 // pred_region
          %s187 = ssub.s32 128, 128
          %188 = vsyncadd %s179, %s187
          %s189 = smul.addr %s20, 128
          %s190 = scalar_lea.hbm %s2, %s189
          %s192 = sshll.u32 %s182, 4
          %s193 = int_to_ptr.vmem [resolvable:$true] %s192
          %195 = dma.vmem_to_hbm [thread:$0]  %s193, 128, %s190, %s179
        $region40: #{tpu_custom_call.1} parent=27 // pred_fallthru
          _
      $region28: #{tpu_custom_call.1} parent=5 // pred_fallthru
        _
      %p196 = scmp.le.s32.totalorder 2, %s15
      // Predicated region
      $region41: #{tpu_custom_call.1} parent=5 // pred_check
        %p197 = pneg %p196
      $region42: #{tpu_custom_call.1} parent=5 // pred_check_branch
        %199 = sbr.rel (%p197) target = $region44
      $region43: #{tpu_custom_call.1} parent=5 // pred_region
        %s200 = ssub.s32 %s15, 2
        // Predicated region
        $region45: #{tpu_custom_call.1} parent=43 // pred_check
          %p201 = pneg %p91
        $region46: #{tpu_custom_call.1} parent=43 // pred_check_branch
          %203 = sbr.rel (%p201) target = $region48
        $region47: #{tpu_custom_call.1} parent=43 // pred_region
          %s204 = sand.u32 %s76, 1
          %s205 = scalar_lea.sflag [#allocation4], %s204
          %s206 = sand.u32 %s76, 1
          %s207 = smul.addr %s206, 8
          %s208 = scalar_lea.vmem [#allocation7], %s207
          %209 = dma.done %s205, 128
        $region48: #{tpu_custom_call.1} parent=43 // pred_fallthru
          _
      $region44: #{tpu_custom_call.1} parent=5 // pred_fallthru
        _
    $region6: #{tpu_custom_call.1} parent=1 // loop_footer
      %s19 = sadd.s32 1, %s15
    $region7: #{tpu_custom_call.1} parent=1 // loop_footer_branch
      %14 = sbr.rel target = $region3
    $region8: #{tpu_custom_call.1} parent=1 // loop_exit
      _
    %210 = vsyncpa [#allocation3], 1
    %s211 = scalar_lea.sflag [#allocation3], 1
    %212 = vsyncpa %s211, 1
    %213 = vsyncpa [#allocation6], 1
    %214 = vsyncpa [#allocation4], 1
    %s215 = scalar_lea.sflag [#allocation4], 1
    %216 = vsyncpa %s215, 1

</llo_original>
